<compile_context>
chip_gen: v6e
topology: v6e:2x2x1
jax: 0.10.0
libtpu: 0.0.40
codegen_flags: <defaults>
</compile_context>

<pallas_src>
import jax
import jax.numpy as jnp
from jax.experimental import pallas as pl
from jax.experimental.pallas import tpu as pltpu

_LANES = 128
_TILE_BYTES = 1 << 20  # ~1 MiB per tensor per grid step (safe on v5e/v6e/v7x)


def _add_kernel(a_ref, b_ref, o_ref):
    # Elementwise hot path: one VPU add over the whole VMEM tile.
    o_ref[...] = a_ref[...] + b_ref[...]


def _sublanes_for(dtype) -> int:
    itemsize = jnp.dtype(dtype).itemsize
    return {4: 8, 2: 16, 1: 32}.get(itemsize, 8)


def _round_up(x: int, m: int) -> int:
    return -(-x // m) * m


def _tiled_add_2d(a2d, b2d, rows: int, dtype):
    """Run the tiled Pallas add on a (rows, 128) lane-dense slab."""
    itemsize = jnp.dtype(dtype).itemsize
    sublanes = _sublanes_for(dtype)

    # Per-tensor tile budget ~1 MiB, rounded down to the sublane multiple.
    budget_rows = max(sublanes, (_TILE_BYTES // (_LANES * itemsize)) // sublanes * sublanes)
    tile_rows = min(budget_rows, _round_up(rows, sublanes))
    grid = (pl.cdiv(rows, tile_rows),)

    spec = pl.BlockSpec((tile_rows, _LANES), lambda i: (i, 0))
    return pl.pallas_call(
        _add_kernel,
        out_shape=jax.ShapeDtypeStruct((rows, _LANES), dtype),
        grid=grid,
        in_specs=[spec, spec],
        out_specs=spec,
        compiler_params=pltpu.CompilerParams(
            # Independent tiles -> parallel (lets v7x shard across its 2 TCs).
            dimension_semantics=("parallel",),
        ),
    )(a2d, b2d)


def multiplicative_operator(base_network_output, plugin_output, *,
                            small_input_bytes: int = 256 * 1024):
    """Pallas implementation of MultiplicativeOperator.forward (elementwise add)."""
    assert base_network_output.shape == plugin_output.shape
    assert base_network_output.dtype == plugin_output.dtype
    orig_shape = base_network_output.shape
    dtype = base_network_output.dtype
    itemsize = jnp.dtype(dtype).itemsize

    n = 1
    for d in orig_shape:
        n *= d

    # Tiny inputs: kernel launch + packing overhead dwarfs the add; XLA's
    # fused elementwise add is already optimal here.
    if 2 * n * itemsize < small_input_bytes:
        return base_network_output + plugin_output

    sublanes = _sublanes_for(dtype)
    chunk = sublanes * _LANES

    if n % chunk == 0:
        # Fast path (common for conv-style NCHW shapes): reshape in place,
        # no padding copy on input and no slice copy on output.
        rows = n // _LANES
        a2d = base_network_output.reshape(rows, _LANES)
        b2d = plugin_output.reshape(rows, _LANES)
        out2d = _tiled_add_2d(a2d, b2d, rows, dtype)
        return out2d.reshape(orig_shape)

    # Ragged path (rare): pad the flattened tensors up to a sublane-aligned
    # number of 128-lane rows, then slice the result back.
    rows_padded = _round_up(pl.cdiv(n, _LANES), sublanes)
    padded_n = rows_padded * _LANES

    def pack(x):
        flat = x.reshape(-1)
        flat = jnp.pad(flat, (0, padded_n - n))
        return flat.reshape(rows_padded, _LANES)

    out2d = _tiled_add_2d(pack(base_network_output), pack(plugin_output),
                          rows_padded, dtype)
    return out2d.reshape(-1)[:n].reshape(orig_shape)


if __name__ == "__main__":
    # MultiplicativeOperator has no parameters (empty __init__).
    key = jax.random.PRNGKey(0)
    k1, k2, k3, k4 = jax.random.split(key, 4)

    # 1) Small NCHW example (force the Pallas fast path so the kernel runs).
    base = jax.random.normal(k1, (2, 4, 16, 16), dtype=jnp.float32)
    plug = jax.random.normal(k2, (2, 4, 16, 16), dtype=jnp.float32)
    out = jax.block_until_ready(
        multiplicative_operator(base, plug, small_input_bytes=0))
    ref = base + plug
    assert out.shape == ref.shape and out.dtype == ref.dtype
    assert jnp.allclose(out, ref, atol=1e-6, rtol=1e-6)

    # 2) Larger aligned NCHW tensor: exercises the tiled multi-step grid.
    base_l = jax.random.normal(k3, (4, 32, 64, 64), dtype=jnp.float32)
    plug_l = jax.random.normal(k4, (4, 32, 64, 64), dtype=jnp.float32)
    out_l = jax.block_until_ready(multiplicative_operator(base_l, plug_l))
    assert jnp.allclose(out_l, base_l + plug_l, atol=1e-6, rtol=1e-6)

    # 3) Ragged size (not a multiple of 1024): pad/slice fallback path.
    base_r = jax.random.normal(k1, (3, 5, 7, 11), dtype=jnp.float32)
    plug_r = jax.random.normal(k2, (3, 5, 7, 11), dtype=jnp.float32)
    out_r = jax.block_until_ready(
        multiplicative_operator(base_r, plug_r, small_input_bytes=0))
    assert jnp.allclose(out_r, base_r + plug_r, atol=1e-6, rtol=1e-6)

    # 4) bf16: dtype-aware sublane alignment (16 rows per tile multiple).
    base_h = jax.random.normal(k3, (2, 4, 16, 16), dtype=jnp.bfloat16)
    plug_h = jax.random.normal(k4, (2, 4, 16, 16), dtype=jnp.bfloat16)
    out_h = jax.block_until_ready(
        multiplicative_operator(base_h, plug_h, small_input_bytes=0))
    assert jnp.allclose(out_h.astype(jnp.float32),
                        (base_h + plug_h).astype(jnp.float32),
                        atol=1e-2, rtol=1e-2)

    print("KERNEL_OK")
</pallas_src>

<mosaic_0001>
module attributes {stable_mosaic.version = 11 : i64} {
  func.func @_add_kernel(%arg0: i32, %arg1: memref<16x128xf32, #tpu.memory_space<vmem>>, %arg2: memref<16x128xf32, #tpu.memory_space<vmem>>, %arg3: memref<16x128xf32, #tpu.memory_space<vmem>>) attributes {dimension_semantics = [#tpu.dimension_semantics<parallel>], iteration_bounds = array<i64: 1>, scalar_prefetch = 0 : i64, scratch_operands = 0 : i64, tpu.core_type = #tpu.core_type<tc>, window_params = [{transform_indices = @transform_0, window_bounds = array<i64: 16, 128>}, {transform_indices = @transform_1, window_bounds = array<i64: 16, 128>}, {transform_indices = @transform_2, window_bounds = array<i64: 16, 128>}]} {
    %c0 = arith.constant 0 : index
    %c0_0 = arith.constant 0 : index
    %0 = vector.load %arg1[%c0, %c0_0] : memref<16x128xf32, #tpu.memory_space<vmem>>, vector<16x128xf32>
    %c0_1 = arith.constant 0 : index
    %c0_2 = arith.constant 0 : index
    %1 = vector.load %arg2[%c0_1, %c0_2] : memref<16x128xf32, #tpu.memory_space<vmem>>, vector<16x128xf32>
    %2 = arith.addf %0, %1 : vector<16x128xf32>
    %c0_3 = arith.constant 0 : index
    %c0_4 = arith.constant 0 : index
    %3 = vector.load %arg3[%c0_3, %c0_4] : memref<16x128xf32, #tpu.memory_space<vmem>>, vector<16x128xf32>
    tpu.vector_store %arg3[%c0_3, %c0_4], %2 {strides = array<i32>} : memref<16x128xf32, #tpu.memory_space<vmem>>, vector<16x128xf32>,
    return
  }
  func.func @transform_0(%arg0: i32) -> (i32, i32) {
    %c0_i32 = arith.constant 0 : i32
    %c0_i32_0 = arith.constant 0 : i32
    return %arg0, %c0_i32 : i32, i32
  }
  func.func @transform_1(%arg0: i32) -> (i32, i32) {
    %c0_i32 = arith.constant 0 : i32
    %c0_i32_0 = arith.constant 0 : i32
    return %arg0, %c0_i32 : i32, i32
  }
  func.func @transform_2(%arg0: i32) -> (i32, i32) {
    %c0_i32 = arith.constant 0 : i32
    %c0_i32_0 = arith.constant 0 : i32
    return %arg0, %c0_i32 : i32, i32
  }
}

</mosaic_0001>

<llo_original>
// kernel: tpu_custom_call.1
$region0: #{tpu_custom_call.1}
  #allocation0 [shape = 'u32[]', space=smem, size = 0x4, offset = 0x4, fixed_abs, tag = 'smem constant byte address 0x4 - core index']
  #allocation1 [shape = 'u32[144,128]{1,0:T(1,128)}', space=vmem, size = 0x12000, scoped, tag = 'internal scratch']
  %s0 = inlined_call_operand.hbm [shape: f32[16,128], index: 0, kind: input, shape index: {}]
  %s1 = inlined_call_operand.hbm [shape: f32[16,128], index: 1, kind: input, shape index: {}]
  %s2 = inlined_call_operand.hbm [shape: f32[16,128], index: 2, kind: output, shape index: {}]
  %s3 = sld [smem:[#allocation0]]
  $region26: #{tpu_custom_call.1} parent=0
    _
  %s5 = ssub.s32 1, %s3
  %s6 = scalar_select 0, %s5, %s3
  $region1: #{tpu_custom_call.1} parent=0
    #allocation2 [shape = 'u8[8192]{0}', space=vmem, size = 0x2000, scoped, tag = 'input window, operand 0, single buffered']
    #allocation3 [shape = 's32[1]{0}', space=sflag, size = 0x4, scoped, tag = 'scoped memory for tpu_custom_call.1']
    #allocation4 [shape = 's32[1]{0}', space=sflag, size = 0x4, scoped, tag = 'scoped memory for tpu_custom_call.1']
    #allocation5 [shape = 'u8[8192]{0}', space=vmem, size = 0x2000, scoped, tag = 'input window, operand 1, single buffered']
    #allocation6 [shape = 's32[1]{0}', space=sflag, size = 0x4, scoped, tag = 'scoped memory for tpu_custom_call.1']
    #allocation7 [shape = 'u8[8192]{0}', space=vmem, size = 0x2000, scoped, tag = 'output window, operand 0, single buffered']
    %7 = vsyncpa [#allocation3], 0
    %8 = vsyncpa [#allocation6], 0
    %9 = vsyncpa [#allocation4], 0
    // Predicated region
    $region2: #{tpu_custom_call.1} parent=1 // pred_check
      _
    $region3: #{tpu_custom_call.1} parent=1 // pred_check_branch
      %11 = sbr.rel (0) target = $region5
    $region4: #{tpu_custom_call.1} parent=1 // pred_region
      %s13 = ssub.s32 256, 256
      %14 = vsyncadd [#allocation3], %s13
      %s15 = sshll.u32 [#allocation2], 4
      %s16 = int_to_ptr.vmem [resolvable:$true] %s15
      %21 = dma.hbm_to_vmem [thread:$0]  %s0, 256, %s16, [#allocation3], 128, 128, 8
    $region5: #{tpu_custom_call.1} parent=1 // pred_fallthru
      _
    // Predicated region
    $region6: #{tpu_custom_call.1} parent=1 // pred_check
      _
    $region7: #{tpu_custom_call.1} parent=1 // pred_check_branch
      %23 = sbr.rel (0) target = $region9
    $region8: #{tpu_custom_call.1} parent=1 // pred_region
      %s25 = ssub.s32 256, 256
      %26 = vsyncadd [#allocation6], %s25
      %s27 = sshll.u32 [#allocation5], 4
      %s28 = int_to_ptr.vmem [resolvable:$true] %s27
      %33 = dma.hbm_to_vmem [thread:$0]  %s1, 256, %s28, [#allocation6], 128, 128, 8
    $region9: #{tpu_custom_call.1} parent=1 // pred_fallthru
      _
    // Predicated region
    $region10: #{tpu_custom_call.1} parent=1 // pred_check
      _
    $region11: #{tpu_custom_call.1} parent=1 // pred_check_branch
      %35 = sbr.rel (0) target = $region13
    $region12: #{tpu_custom_call.1} parent=1 // pred_region
      %36 = dma.done [#allocation3], 256
    $region13: #{tpu_custom_call.1} parent=1 // pred_fallthru
      _
    // Predicated region
    $region14: #{tpu_custom_call.1} parent=1 // pred_check
      _
    $region15: #{tpu_custom_call.1} parent=1 // pred_check_branch
      %38 = sbr.rel (0) target = $region17
    $region16: #{tpu_custom_call.1} parent=1 // pred_region
      %39 = dma.done [#allocation6], 256
    $region17: #{tpu_custom_call.1} parent=1 // pred_fallthru
      _
    %v40 = vld [vmem:[#allocation2] sm:$0xff]
    %v41 = vld [vmem:[#allocation2 + $0x8] sm:$0xff]
    %v42 = vld [vmem:[#allocation5] sm:$0xff]
    %v43 = vld [vmem:[#allocation5 + $0x8] sm:$0xff]
    %v44 = vadd.f32 %v40, %v42
    %v45 = vadd.f32 %v41, %v43
    %46 = vst [vmem:[#allocation7] sm:$0xff] %v44
    %47 = vst [vmem:[#allocation7 + $0x8] sm:$0xff] %v45
    // Predicated region
    $region18: #{tpu_custom_call.1} parent=1 // pred_check
      _
    $region19: #{tpu_custom_call.1} parent=1 // pred_check_branch
      %49 = sbr.rel (0) target = $region21
    $region20: #{tpu_custom_call.1} parent=1 // pred_region
      %s51 = ssub.s32 256, 256
      %52 = vsyncadd [#allocation4], %s51
      %s53 = sshll.u32 [#allocation7], 4
      %s54 = int_to_ptr.vmem [resolvable:$true] %s53
      %59 = dma.vmem_to_hbm [thread:$0]  %s54, 256, %s2, [#allocation4], 128, 128, 8
    $region21: #{tpu_custom_call.1} parent=1 // pred_fallthru
      _
    // Predicated region
    $region22: #{tpu_custom_call.1} parent=1 // pred_check
      _
    $region23: #{tpu_custom_call.1} parent=1 // pred_check_branch
      %61 = sbr.rel (0) target = $region25
    $region24: #{tpu_custom_call.1} parent=1 // pred_region
      %62 = dma.done [#allocation4], 256
    $region25: #{tpu_custom_call.1} parent=1 // pred_fallthru
      _
    %63 = vsyncpa [#allocation3], 1
    %64 = vsyncpa [#allocation6], 1
    %65 = vsyncpa [#allocation4], 1

</llo_original>
